<compile_context>
chip_gen: v5e
topology: v5e:2x2
jax: 0.10.0
libtpu: 0.0.40
codegen_flags: <defaults>
</compile_context>

<pallas_src>
import jax
import jax.numpy as jnp
from jax import lax
from jax.experimental import pallas as pl
from jax.experimental.pallas import tpu as pltpu


def _qnet_kernel(x_ref, w1_ref, b1_ref, w2_ref, b2_ref, o_ref):
    # hidden = relu(x @ W1t + b1); W1t is (in, hid_pad): standard (last, first)
    # contraction -> no per-step layout shuffle. Cast x in-kernel (it is already
    # in VMEM) so the wrapper never runs an astype pass over x in HBM.
    x = x_ref[...].astype(w1_ref.dtype)
    h = jnp.dot(x, w1_ref[...], preferred_element_type=jnp.float32)   # (tm, hid_pad) f32
    h = jnp.maximum(h + b1_ref[...], 0.0)                             # full-lane VPU epilogue

    # out = hidden @ W2t + b2; W2t is (hid_pad, out). Padded hidden rows are 0.
    o = jnp.dot(h.astype(w2_ref.dtype), w2_ref[...],
                preferred_element_type=jnp.float32)                   # (tm, out) f32
    o_ref[...] = (o + b2_ref[...]).astype(o_ref.dtype)


def _round_up(n, m):
    return -(-n // m) * m


def qnet_forward_pallas(x, w1, b1, w2, b2, *, block_rows=2048,
                        compute_dtype=None, vmem_limit_bytes=None):
    """Fused MLP forward with PyTorch-layout params.

    x: (B, in), w1: (hid, in), b1: (hid,), w2: (out, hid), b2: (out,).
    compute_dtype: optional narrow dtype (e.g. jnp.bfloat16) for the resident
    weights on v5e/v6e/v7x; accumulation + bias + ReLU stay f32 in-kernel.
    """
    B, in_size = x.shape
    hid = w1.shape[0]
    out = w2.shape[0]
    out_dtype = x.dtype

    # One-time weight prep (tiny tensors; in a training loop do this once per
    # param update, not per forward): lane-pad hidden dim and pre-transpose.
    hid_pad = _round_up(hid, 128)
    w1t = jnp.pad(w1, ((0, hid_pad - hid), (0, 0))).T            # (in, hid_pad)
    w2t = jnp.pad(w2, ((0, 0), (0, hid_pad - hid))).T            # (hid_pad, out)
    b1r = jnp.pad(b1.astype(jnp.float32), (0, hid_pad - hid)).reshape(1, hid_pad)
    b2r = b2.astype(jnp.float32).reshape(1, out)

    if compute_dtype is not None:
        # Only the resident weights are narrowed; x is cast inside the kernel.
        w1t = w1t.astype(compute_dtype)
        w2t = w2t.astype(compute_dtype)

    # Batch tiling: no pad of x, no output slice -- rely on Pallas boundary
    # masking for the ragged tail. Guarantee >=2 grid steps for large B so the
    # "parallel" batch axis can use both TensorCores on v7x.
    if B >= 256:
        tm = min(block_rows, _round_up(pl.cdiv(B, 2), 8))
    else:
        tm = B                      # single step; block == full array dim (always legal)
    grid = (pl.cdiv(B, tm),)

    resident = lambda shape: pl.BlockSpec(shape, lambda i: (0, 0))

    return pl.pallas_call(
        _qnet_kernel,
        out_shape=jax.ShapeDtypeStruct((B, out), out_dtype),
        grid=grid,
        in_specs=[
            pl.BlockSpec((tm, in_size), lambda i: (i, 0)),  # x: streamed over batch
            resident((in_size, hid_pad)),                   # W1t: resident in VMEM
            resident((1, hid_pad)),                         # b1 (padded): resident
            resident((hid_pad, out)),                       # W2t: resident in VMEM
            resident((1, out)),                             # b2: resident
        ],
        out_specs=pl.BlockSpec((tm, out), lambda i: (i, 0)),
        compiler_params=pltpu.CompilerParams(
            dimension_semantics=("parallel",),   # batch axis -> both TCs on v7x
            vmem_limit_bytes=vmem_limit_bytes),
    )(x, w1t, b1r, w2t, b2r)


def qnet_forward(x, w1, b1, w2, b2, *, use_pallas=None, **kwargs):
    """Dispatch: plain XLA for tiny batches (a standalone custom call is pure
    launch/DMA overhead there), Pallas kernel for replay-buffer-sized batches."""
    B = x.shape[0]
    if use_pallas is None:
        use_pallas = B >= 256
    if not use_pallas:
        return (jnp.maximum(x @ w1.T + b1, 0.0) @ w2.T + b2).astype(x.dtype)
    return qnet_forward_pallas(x, w1, b1, w2, b2, **kwargs)


def init_params(key, input_size, hidden_size, output_size, dtype=jnp.float32):
    """Deterministic synthetic init (PyTorch nn.Linear-style uniform bounds)."""
    k1, k2, k3, k4 = jax.random.split(key, 4)
    bound1 = 1.0 / (input_size ** 0.5)
    bound2 = 1.0 / (hidden_size ** 0.5)
    w1 = jax.random.uniform(k1, (hidden_size, input_size), dtype, -bound1, bound1)
    b1 = jax.random.uniform(k2, (hidden_size,), dtype, -bound1, bound1)
    w2 = jax.random.uniform(k3, (output_size, hidden_size), dtype, -bound2, bound2)
    b2 = jax.random.uniform(k4, (output_size,), dtype, -bound2, bound2)
    return w1, b1, w2, b2


# TODO(synk): Linear_QNet.save() is host-side file I/O (torch.save); no kernel
# equivalent, intentionally not implemented.

if __name__ == "__main__":
    # Small shapes consistent with Linear_QNet(input, hidden, output).
    batch, input_size, hidden_size, output_size = 4, 16, 32, 8

    key = jax.random.PRNGKey(0)
    kx, kp = jax.random.split(key)
    x = jax.random.normal(kx, (batch, input_size), jnp.float32)
    w1, b1, w2, b2 = init_params(kp, input_size, hidden_size, output_size)

    # 1) Force the Pallas path at the tiny test shape (single grid step).
    out = qnet_forward(x, w1, b1, w2, b2, use_pallas=True)
    out = jax.block_until_ready(out)
    ref = jnp.maximum(x @ w1.T + b1, 0.0) @ w2.T + b2
    assert out.shape == (batch, output_size)
    assert jnp.allclose(out, ref, atol=1e-5, rtol=1e-5)

    # 2) Exercise the batch-tiled path: B=1000 -> 2 grid steps (tm=504), ragged
    #    tail handled by boundary masking, exact (B, out) output (no slicing).
    kx2 = jax.random.fold_in(kx, 1)
    xb = jax.random.normal(kx2, (1000, input_size), jnp.float32)
    outb = qnet_forward(xb, w1, b1, w2, b2, use_pallas=True)
    outb = jax.block_until_ready(outb)
    refb = jnp.maximum(xb @ w1.T + b1, 0.0) @ w2.T + b2
    assert outb.shape == (1000, output_size)
    assert jnp.allclose(outb, refb, atol=1e-5, rtol=1e-5)

    # 3) Narrow-operand path (bf16 weights, in-kernel x cast, f32 epilogue).
    outc = qnet_forward(xb, w1, b1, w2, b2, use_pallas=True,
                        compute_dtype=jnp.bfloat16)
    outc = jax.block_until_ready(outc)
    assert outc.shape == (1000, output_size)
    assert jnp.allclose(outc, refb, atol=5e-2, rtol=5e-2)

    print("KERNEL_OK")
</pallas_src>

<mosaic_0001>
module attributes {stable_mosaic.version = 11 : i64} {
  func.func @_qnet_kernel(%arg0: i32, %arg1: memref<4x16xf32, #tpu.memory_space<vmem>>, %arg2: memref<16x128xf32, #tpu.memory_space<vmem>>, %arg3: memref<1x128xf32, #tpu.memory_space<vmem>>, %arg4: memref<128x8xf32, #tpu.memory_space<vmem>>, %arg5: memref<1x8xf32, #tpu.memory_space<vmem>>, %arg6: memref<4x8xf32, #tpu.memory_space<vmem>>) attributes {dimension_semantics = [#tpu.dimension_semantics<parallel>], iteration_bounds = array<i64: 1>, scalar_prefetch = 0 : i64, scratch_operands = 0 : i64, tpu.core_type = #tpu.core_type<tc>, window_params = [{transform_indices = @transform_0, window_bounds = array<i64: 4, 16>}, {pipeline_mode = #tpu.pipeline_mode<synchronous>, transform_indices = @transform_1, window_bounds = array<i64: 16, 128>}, {pipeline_mode = #tpu.pipeline_mode<synchronous>, transform_indices = @transform_2, window_bounds = array<i64: 1, 128>}, {pipeline_mode = #tpu.pipeline_mode<synchronous>, transform_indices = @transform_3, window_bounds = array<i64: 128, 8>}, {pipeline_mode = #tpu.pipeline_mode<synchronous>, transform_indices = @transform_4, window_bounds = array<i64: 1, 8>}, {transform_indices = @transform_5, window_bounds = array<i64: 4, 8>}]} {
    %c0 = arith.constant 0 : index
    %c0_0 = arith.constant 0 : index
    %0 = vector.load %arg1[%c0, %c0_0] : memref<4x16xf32, #tpu.memory_space<vmem>>, vector<4x16xf32>
    %c0_1 = arith.constant 0 : index
    %c0_2 = arith.constant 0 : index
    %1 = vector.load %arg2[%c0_1, %c0_2] : memref<16x128xf32, #tpu.memory_space<vmem>>, vector<16x128xf32>
    %cst = arith.constant dense<0.000000e+00> : vector<4x128xf32>
    %2 = tpu.matmul %0, %1, %cst {dimension_numbers = #tpu.dot_dimension_numbers<[1], [0], [0], [1], [0, 0, 1, 1], [], []>} : vector<4x16xf32>, vector<16x128xf32>, vector<4x128xf32> -> vector<4x128xf32>
    %c0_3 = arith.constant 0 : index
    %c0_4 = arith.constant 0 : index
    %3 = vector.load %arg3[%c0_3, %c0_4] : memref<1x128xf32, #tpu.memory_space<vmem>>, vector<1x128xf32>
    %4 = vector.broadcast %3 : vector<1x128xf32> to vector<4x128xf32>
    %5 = arith.addf %2, %4 : vector<4x128xf32>
    %cst_5 = arith.constant 0.000000e+00 : f32
    %6 = vector.broadcast %cst_5 : f32 to vector<4x128xf32>
    %7 = arith.maximumf %5, %6 : vector<4x128xf32>
    %c0_6 = arith.constant 0 : index
    %c0_7 = arith.constant 0 : index
    %8 = vector.load %arg4[%c0_6, %c0_7] : memref<128x8xf32, #tpu.memory_space<vmem>>, vector<128x8xf32>
    %cst_8 = arith.constant dense<0.000000e+00> : vector<4x8xf32>
    %9 = tpu.matmul %7, %8, %cst_8 {dimension_numbers = #tpu.dot_dimension_numbers<[1], [0], [0], [1], [0, 0, 1, 1], [], []>} : vector<4x128xf32>, vector<128x8xf32>, vector<4x8xf32> -> vector<4x8xf32>
    %c0_9 = arith.constant 0 : index
    %c0_10 = arith.constant 0 : index
    %10 = vector.load %arg5[%c0_9, %c0_10] : memref<1x8xf32, #tpu.memory_space<vmem>>, vector<1x8xf32>
    %11 = vector.broadcast %10 : vector<1x8xf32> to vector<4x8xf32>
    %12 = arith.addf %9, %11 : vector<4x8xf32>
    %c0_11 = arith.constant 0 : index
    %c0_12 = arith.constant 0 : index
    %13 = vector.load %arg6[%c0_11, %c0_12] : memref<4x8xf32, #tpu.memory_space<vmem>>, vector<4x8xf32>
    tpu.vector_store %arg6[%c0_11, %c0_12], %12 {strides = array<i32>} : memref<4x8xf32, #tpu.memory_space<vmem>>, vector<4x8xf32>,
    return
  }
  func.func @transform_0(%arg0: i32) -> (i32, i32) {
    %c0_i32 = arith.constant 0 : i32
    %c0_i32_0 = arith.constant 0 : i32
    return %arg0, %c0_i32 : i32, i32
  }
  func.func @transform_1(%arg0: i32) -> (i32, i32) {
    %c0_i32 = arith.constant 0 : i32
    %c0_i32_0 = arith.constant 0 : i32
    %c0_i32_1 = arith.constant 0 : i32
    return %c0_i32, %c0_i32_0 : i32, i32
  }
  func.func @transform_2(%arg0: i32) -> (i32, i32) {
    %c0_i32 = arith.constant 0 : i32
    %c0_i32_0 = arith.constant 0 : i32
    %c0_i32_1 = arith.constant 0 : i32
    return %c0_i32, %c0_i32_0 : i32, i32
  }
  func.func @transform_3(%arg0: i32) -> (i32, i32) {
    %c0_i32 = arith.constant 0 : i32
    %c0_i32_0 = arith.constant 0 : i32
    %c0_i32_1 = arith.constant 0 : i32
    return %c0_i32, %c0_i32_0 : i32, i32
  }
  func.func @transform_4(%arg0: i32) -> (i32, i32) {
    %c0_i32 = arith.constant 0 : i32
    %c0_i32_0 = arith.constant 0 : i32
    %c0_i32_1 = arith.constant 0 : i32
    return %c0_i32, %c0_i32_0 : i32, i32
  }
  func.func @transform_5(%arg0: i32) -> (i32, i32) {
    %c0_i32 = arith.constant 0 : i32
    %c0_i32_0 = arith.constant 0 : i32
    return %arg0, %c0_i32 : i32, i32
  }
}

</mosaic_0001>

<llo_original>
// kernel: tpu_custom_call.1
$region0: #{tpu_custom_call.1}
  #allocation0 [shape = 'u32[]', space=smem, size = 0x4, offset = 0x4, fixed_abs, tag = 'smem constant byte address 0x4 - core index']
  #allocation1 [shape = 'u32[72,128]{1,0:T(1,128)}', space=vmem, size = 0x9000, scoped, tag = 'internal scratch']
  %s0 = inlined_call_operand.vmem [shape: f32[4,16], index: 0, kind: input, shape index: {}]
  %s1 = inlined_call_operand.vmem [shape: f32[16,128], index: 1, kind: input, shape index: {}]
  %s2 = inlined_call_operand.vmem [shape: f32[1,128], index: 2, kind: input, shape index: {}]
  %s3 = inlined_call_operand.vmem [shape: f32[128,8], index: 3, kind: input, shape index: {}]
  %s4 = inlined_call_operand.vmem [shape: f32[1,8], index: 4, kind: input, shape index: {}]
  %s5 = inlined_call_operand.hbm [shape: f32[4,8], index: 5, kind: output, shape index: {}]
  %s6 = sld [smem:[#allocation0]]
  $region30: #{tpu_custom_call.1} parent=0
    _
  %s8 = ssub.s32 1, %s6
  %s9 = scalar_select 0, %s8, %s6
  $region1: #{tpu_custom_call.1} parent=0
    #allocation2 [shape = 'u8[2048]{0}', space=vmem, size = 0x800, scoped, tag = 'output window, operand 0, single buffered']
    #allocation3 [shape = 's32[1]{0}', space=sflag, size = 0x4, scoped, tag = 'scoped memory for tpu_custom_call.1']
    %10 = vsyncpa [#allocation3], 0
    // Predicated region
    $region2: #{tpu_custom_call.1} parent=1 // pred_check
      _
    $region3: #{tpu_custom_call.1} parent=1 // pred_check_branch
      %12 = sbr.rel (0) target = $region5
    $region4: #{tpu_custom_call.1} parent=1 // pred_region
      _
    $region5: #{tpu_custom_call.1} parent=1 // pred_fallthru
      _
    // Predicated region
    $region6: #{tpu_custom_call.1} parent=1 // pred_check
      _
    $region7: #{tpu_custom_call.1} parent=1 // pred_check_branch
      %14 = sbr.rel (0) target = $region9
    $region8: #{tpu_custom_call.1} parent=1 // pred_region
      _
    $region9: #{tpu_custom_call.1} parent=1 // pred_fallthru
      _
    // Predicated region
    $region10: #{tpu_custom_call.1} parent=1 // pred_check
      _
    $region11: #{tpu_custom_call.1} parent=1 // pred_check_branch
      %16 = sbr.rel (0) target = $region13
    $region12: #{tpu_custom_call.1} parent=1 // pred_region
      _
    $region13: #{tpu_custom_call.1} parent=1 // pred_fallthru
      _
    // Predicated region
    $region14: #{tpu_custom_call.1} parent=1 // pred_check
      _
    $region15: #{tpu_custom_call.1} parent=1 // pred_check_branch
      %18 = sbr.rel (0) target = $region17
    $region16: #{tpu_custom_call.1} parent=1 // pred_region
      _
    $region17: #{tpu_custom_call.1} parent=1 // pred_fallthru
      _
    // Predicated region
    $region18: #{tpu_custom_call.1} parent=1 // pred_check
      _
    $region19: #{tpu_custom_call.1} parent=1 // pred_check_branch
      %20 = sbr.rel (0) target = $region21
    $region20: #{tpu_custom_call.1} parent=1 // pred_region
      _
    $region21: #{tpu_custom_call.1} parent=1 // pred_fallthru
      _
    %v21 = vld [vmem:[%s0] sm:$0xf]
    %v22 = vld [vmem:[%s1] sm:$0xff]
    %v23 = vld [vmem:[%s1 + $0x8] sm:$0xff]
    %v24 = vld [vmem:[%s2] sm:$0x1]
    %v26 = vperm.slane %v24, 0
    %vm28 = vcmask 130048
    %v30 = vsel %vm28, %v21, 0
    %32 = vmatpush.msra.mxu0 0.0
    %33 = vmatpush.msra.mxu0 0.0
    %34 = vmatpush.msra.mxu0 0.0
    %35 = vmatpush.msra.mxu0 0.0
    %36 = vmatpush.msra.mxu0 0.0
    %37 = vmatpush.msra.mxu0 0.0
    %38 = vmatpush.msra.mxu0 0.0
    %39 = vmatpush.msra.mxu0 0.0
    %40 = vmatpush.msra.mxu0 0.0
    %41 = vmatpush.msra.mxu0 0.0
    %42 = vmatpush.msra.mxu0 0.0
    %43 = vmatpush.msra.mxu0 0.0
    %44 = vmatpush.msra.mxu0 0.0
    %45 = vmatpush.msra.mxu0 0.0
    %46 = vmatpush.msra.mxu0 %v23
    %47 = vmatpush.msra.mxu0 %v22
    %48 = vmatmul.f32.gmra.mxu0 %v30
    %v49 = vpop.f32.mrf.mxu0
    %v50 = vadd.f32 %v26, %v49
    %51 = vdwg.mxu0
    %v52 = vmax.f32 %v50, 0.0
    %v53 = vld [vmem:[%s3] sm:$0xff]
    %v54 = vld [vmem:[%s3 + $0x8] sm:$0xff]
    %v55 = vld [vmem:[%s3 + $0x10] sm:$0xff]
    %v56 = vld [vmem:[%s3 + $0x18] sm:$0xff]
    %v57 = vld [vmem:[%s3 + $0x20] sm:$0xff]
    %v58 = vld [vmem:[%s3 + $0x28] sm:$0xff]
    %v59 = vld [vmem:[%s3 + $0x30] sm:$0xff]
    %v60 = vld [vmem:[%s3 + $0x38] sm:$0xff]
    %v61 = vld [vmem:[%s3 + $0x40] sm:$0xff]
    %v62 = vld [vmem:[%s3 + $0x48] sm:$0xff]
    %v63 = vld [vmem:[%s3 + $0x50] sm:$0xff]
    %v64 = vld [vmem:[%s3 + $0x58] sm:$0xff]
    %v65 = vld [vmem:[%s3 + $0x60] sm:$0xff]
    %v66 = vld [vmem:[%s3 + $0x68] sm:$0xff]
    %v67 = vld [vmem:[%s3 + $0x70] sm:$0xff]
    %v68 = vld [vmem:[%s3 + $0x78] sm:$0xff]
    %v69 = vld [vmem:[%s4] sm:$0x1]
    %v71 = vperm.slane %v69, 0
    %73 = vmatpush.msra.mxu0 %v68
    %74 = vmatpush.msra.mxu0 %v67
    %75 = vmatpush.msra.mxu0 %v66
    %76 = vmatpush.msra.mxu0 %v65
    %77 = vmatpush.msra.mxu0 %v64
    %78 = vmatpush.msra.mxu0 %v63
    %79 = vmatpush.msra.mxu0 %v62
    %80 = vmatpush.msra.mxu0 %v61
    %81 = vmatpush.msra.mxu0 %v60
    %82 = vmatpush.msra.mxu0 %v59
    %83 = vmatpush.msra.mxu0 %v58
    %84 = vmatpush.msra.mxu0 %v57
    %85 = vmatpush.msra.mxu0 %v56
    %86 = vmatpush.msra.mxu0 %v55
    %87 = vmatpush.msra.mxu0 %v54
    %88 = vmatpush.msra.mxu0 %v53
    %89 = vmatmul.f32.gmra.mxu0 %v52
    %v90 = vpop.f32.mrf.mxu0
    %v91 = vadd.f32 %v71, %v90
    %92 = vdwg.mxu0
    %vm93 = vcmask 60416
    %94 = vst.msk [vmem:[#allocation2] sm:$0xf] %vm93, %v91
    // Predicated region
    $region22: #{tpu_custom_call.1} parent=1 // pred_check
      _
    $region23: #{tpu_custom_call.1} parent=1 // pred_check_branch
      %96 = sbr.rel (0) target = $region25
    $region24: #{tpu_custom_call.1} parent=1 // pred_region
      %98 = vsyncadd [#allocation3], 0
      %s100 = sshll.u32 [#allocation2], 4
      %s101 = int_to_ptr.vmem [resolvable:$true] %s100
      %s102 = sshll.u32 %s5, 4
      %s103 = int_to_ptr.hbm [resolvable:$true] %s102
      %105 = dma.vmem_to_hbm [thread:$0]  %s101, 64, %s103, [#allocation3]
    $region25: #{tpu_custom_call.1} parent=1 // pred_fallthru
      _
    // Predicated region
    $region26: #{tpu_custom_call.1} parent=1 // pred_check
      _
    $region27: #{tpu_custom_call.1} parent=1 // pred_check_branch
      %107 = sbr.rel (0) target = $region29
    $region28: #{tpu_custom_call.1} parent=1 // pred_region
      %109 = dma.done [#allocation3], 64
    $region29: #{tpu_custom_call.1} parent=1 // pred_fallthru
      _
    %110 = vsyncpa [#allocation3], 1

</llo_original>
